<compile_context>
chip_gen: v7x
topology: tpu7x:2x2x1
jax: 0.10.0
libtpu: 0.0.40
codegen_flags: <defaults>
</compile_context>

<pallas_src>
import functools

import jax
import jax.numpy as jnp
from jax.experimental import pallas as pl
from jax.experimental.pallas import tpu as pltpu


def generator_kernel(z_ref, w1_ref, b1_ref, w2_ref, b2_ref, o_ref):
    # Two MXU matmuls (bf16 in, f32 accumulate) + VPU bias/ReLU + EUP tanh,
    # fused over one lane-dense (tile_b, IMG) output slab per grid step.
    h = jnp.dot(z_ref[...], w1_ref[...], preferred_element_type=jnp.float32)
    h = jnp.maximum(h + b1_ref[...], 0.0)                        # bias + ReLU (VPU)
    h = h.astype(w2_ref.dtype)                                   # stay on bf16 MXU path
    y = jnp.dot(h, w2_ref[...], preferred_element_type=jnp.float32)
    o_ref[...] = jnp.tanh(y + b2_ref[...]).astype(o_ref.dtype)   # bias + Tanh (EUP)


def _round_up(x, m):
    return ((x + m - 1) // m) * m


def _pick_tile_b(batch, latent_dim, img_size, in_bytes, out_bytes,
                 vmem_budget_bytes=8 * 1024 * 1024, cap=2048):
    """Largest multiple-of-8 batch tile that fits the VMEM budget for the
    double-buffered z/out streams, preferring >= 2 grid steps (v7x 2 TCs)."""
    per_row = 2 * (latent_dim * in_bytes + img_size * out_bytes)  # 2x: double buffer
    fit = max(8, min(cap, (vmem_budget_bytes // per_row) // 8 * 8))
    if batch <= 16:
        return _round_up(batch, 8)
    two_step = _round_up(pl.cdiv(batch, 2), 8)  # keep >= 2 grid steps if possible
    return min(fit, two_step)


@functools.partial(jax.jit, static_argnames=("compute_dtype", "out_dtype"))
def generator_forward(z, w1, b1, w2, b2, *,
                      compute_dtype=jnp.bfloat16, out_dtype=jnp.bfloat16):
    """z: (B, latent_dim) -> (B, img_size); same math as the PyTorch module."""
    B, L = z.shape
    H = w1.shape[1]
    IMG = w2.shape[1]

    in_bytes = jnp.dtype(compute_dtype).itemsize
    out_bytes = jnp.dtype(out_dtype).itemsize
    tile_b = _pick_tile_b(B, L, IMG, in_bytes, out_bytes)
    Bp = _round_up(B, tile_b)
    grid = (Bp // tile_b,)

    zc = z.astype(compute_dtype)
    if Bp != B:
        zc = jnp.pad(zc, ((0, Bp - B), (0, 0)))  # padded rows discarded below
    w1c = w1.astype(compute_dtype)
    w2c = w2.astype(compute_dtype)
    b1f = b1.reshape(1, H).astype(jnp.float32)
    b2f = b2.reshape(1, IMG).astype(jnp.float32)

    cost = pl.CostEstimate(
        flops=2 * Bp * (L * H + H * IMG),
        transcendentals=Bp * IMG,  # tanh
        bytes_accessed=(zc.size * in_bytes + w1c.size * in_bytes
                        + w2c.size * in_bytes + b1f.size * 4 + b2f.size * 4
                        + Bp * IMG * out_bytes),
    )

    out = pl.pallas_call(
        generator_kernel,
        out_shape=jax.ShapeDtypeStruct((Bp, IMG), out_dtype),
        grid_spec=pltpu.PrefetchScalarGridSpec(
            num_scalar_prefetch=0,
            grid=grid,
            in_specs=[
                pl.BlockSpec((tile_b, L), lambda i: (i, 0)),  # z tile (streams)
                pl.BlockSpec((L, H), lambda i: (0, 0)),       # W1 (grid-invariant, resident)
                pl.BlockSpec((1, H), lambda i: (0, 0)),       # b1 (resident)
                pl.BlockSpec((H, IMG), lambda i: (0, 0)),     # W2 (resident)
                pl.BlockSpec((1, IMG), lambda i: (0, 0)),     # b2 (resident)
            ],
            out_specs=pl.BlockSpec((tile_b, IMG), lambda i: (i, 0)),
        ),
        compiler_params=pltpu.CompilerParams(
            # single grid axis over independent batch tiles -> v7x megacore sharding
            dimension_semantics=("parallel",),
        ),
        cost_estimate=cost,
    )(zc, w1c, b1f, w2c, b2f)

    if Bp != B:
        out = out[:B]
    return out


def init_params(key, latent_dim, img_size, hidden=128):
    """Deterministic PyTorch-style uniform(-1/sqrt(fan_in), 1/sqrt(fan_in)) init."""
    k1, k2, k3, k4 = jax.random.split(key, 4)
    bound1 = 1.0 / jnp.sqrt(latent_dim)
    bound2 = 1.0 / jnp.sqrt(hidden)
    w1 = jax.random.uniform(k1, (latent_dim, hidden), jnp.float32, -bound1, bound1)
    b1 = jax.random.uniform(k2, (1, hidden), jnp.float32, -bound1, bound1)
    w2 = jax.random.uniform(k3, (hidden, img_size), jnp.float32, -bound2, bound2)
    b2 = jax.random.uniform(k4, (1, img_size), jnp.float32, -bound2, bound2)
    return w1, b1, w2, b2


if __name__ == "__main__":
    latent_dim = 32
    img_size = 256   # e.g. flattened 16x16 image
    batch = 50       # deliberately NOT a tile multiple -> exercises padding path

    key = jax.random.PRNGKey(0)
    kz, kp = jax.random.split(key)
    z = jax.random.normal(kz, (batch, latent_dim), jnp.float32)
    w1, b1, w2, b2 = init_params(kp, latent_dim, img_size)

    out = generator_forward(z, w1, b1, w2, b2)
    out = jax.block_until_ready(out)

    # Pure-JAX f32 reference of the same math. bf16 MXU inputs + f32 accumulation
    # keep the error small but not 1e-5-small -> bf16-appropriate tolerance.
    ref = jnp.tanh(jnp.maximum(z @ w1 + b1, 0.0) @ w2 + b2)
    assert out.shape == (batch, img_size)
    assert jnp.allclose(out.astype(jnp.float32), ref, atol=3e-2, rtol=0.0)

    print("KERNEL_OK")
</pallas_src>

<mosaic_0001>
module attributes {stable_mosaic.version = 11 : i64} {
  func.func @generator_kernel(%arg0: i32, %arg1: memref<32x32xbf16, #tpu.memory_space<vmem>>, %arg2: memref<32x128xbf16, #tpu.memory_space<vmem>>, %arg3: memref<1x128xf32, #tpu.memory_space<vmem>>, %arg4: memref<128x256xbf16, #tpu.memory_space<vmem>>, %arg5: memref<1x256xf32, #tpu.memory_space<vmem>>, %arg6: memref<32x256xbf16, #tpu.memory_space<vmem>>) attributes {dimension_semantics = [#tpu.dimension_semantics<parallel>], iteration_bounds = array<i64: 2>, scalar_prefetch = 0 : i64, scratch_operands = 0 : i64, tpu.core_type = #tpu.core_type<tc>, window_params = [{transform_indices = @transform_0, window_bounds = array<i64: 32, 32>}, {pipeline_mode = #tpu.pipeline_mode<synchronous>, transform_indices = @transform_1, window_bounds = array<i64: 32, 128>}, {pipeline_mode = #tpu.pipeline_mode<synchronous>, transform_indices = @transform_2, window_bounds = array<i64: 1, 128>}, {pipeline_mode = #tpu.pipeline_mode<synchronous>, transform_indices = @transform_3, window_bounds = array<i64: 128, 256>}, {pipeline_mode = #tpu.pipeline_mode<synchronous>, transform_indices = @transform_4, window_bounds = array<i64: 1, 256>}, {transform_indices = @transform_5, window_bounds = array<i64: 32, 256>}]} {
    %c0 = arith.constant 0 : index
    %c0_0 = arith.constant 0 : index
    %0 = vector.load %arg1[%c0, %c0_0] : memref<32x32xbf16, #tpu.memory_space<vmem>>, vector<32x32xbf16>
    %c0_1 = arith.constant 0 : index
    %c0_2 = arith.constant 0 : index
    %1 = vector.load %arg2[%c0_1, %c0_2] : memref<32x128xbf16, #tpu.memory_space<vmem>>, vector<32x128xbf16>
    %cst = arith.constant dense<0.000000e+00> : vector<32x128xf32>
    %2 = tpu.matmul %0, %1, %cst {dimension_numbers = #tpu.dot_dimension_numbers<[1], [0], [0], [1], [0, 0, 1, 1], [], []>} : vector<32x32xbf16>, vector<32x128xbf16>, vector<32x128xf32> -> vector<32x128xf32>
    %c0_3 = arith.constant 0 : index
    %c0_4 = arith.constant 0 : index
    %3 = vector.load %arg3[%c0_3, %c0_4] : memref<1x128xf32, #tpu.memory_space<vmem>>, vector<1x128xf32>
    %4 = vector.broadcast %3 : vector<1x128xf32> to vector<32x128xf32>
    %5 = arith.addf %2, %4 : vector<32x128xf32>
    %cst_5 = arith.constant 0.000000e+00 : f32
    %6 = vector.broadcast %cst_5 : f32 to vector<32x128xf32>
    %7 = arith.maximumf %5, %6 : vector<32x128xf32>
    %8 = arith.truncf %7 : vector<32x128xf32> to vector<32x128xbf16>
    %c0_6 = arith.constant 0 : index
    %c0_7 = arith.constant 0 : index
    %9 = vector.load %arg4[%c0_6, %c0_7] : memref<128x256xbf16, #tpu.memory_space<vmem>>, vector<128x256xbf16>
    %cst_8 = arith.constant dense<0.000000e+00> : vector<32x256xf32>
    %10 = tpu.matmul %8, %9, %cst_8 {dimension_numbers = #tpu.dot_dimension_numbers<[1], [0], [0], [1], [0, 0, 1, 1], [], []>} : vector<32x128xbf16>, vector<128x256xbf16>, vector<32x256xf32> -> vector<32x256xf32>
    %c0_9 = arith.constant 0 : index
    %c0_10 = arith.constant 0 : index
    %11 = vector.load %arg5[%c0_9, %c0_10] : memref<1x256xf32, #tpu.memory_space<vmem>>, vector<1x256xf32>
    %12 = vector.broadcast %11 : vector<1x256xf32> to vector<32x256xf32>
    %13 = arith.addf %10, %12 : vector<32x256xf32>
    %14 = math.tanh %13 : vector<32x256xf32>
    %15 = arith.truncf %14 : vector<32x256xf32> to vector<32x256xbf16>
    %c0_11 = arith.constant 0 : index
    %c0_12 = arith.constant 0 : index
    %16 = vector.load %arg6[%c0_11, %c0_12] : memref<32x256xbf16, #tpu.memory_space<vmem>>, vector<32x256xbf16>
    tpu.vector_store %arg6[%c0_11, %c0_12], %15 {strides = array<i32>} : memref<32x256xbf16, #tpu.memory_space<vmem>>, vector<32x256xbf16>,
    return
  }
  func.func @transform_0(%arg0: i32) -> (i32, i32) {
    %c0_i32 = arith.constant 0 : i32
    %c0_i32_0 = arith.constant 0 : i32
    return %arg0, %c0_i32 : i32, i32
  }
  func.func @transform_1(%arg0: i32) -> (i32, i32) {
    %c0_i32 = arith.constant 0 : i32
    %c0_i32_0 = arith.constant 0 : i32
    %c0_i32_1 = arith.constant 0 : i32
    return %c0_i32, %c0_i32_0 : i32, i32
  }
  func.func @transform_2(%arg0: i32) -> (i32, i32) {
    %c0_i32 = arith.constant 0 : i32
    %c0_i32_0 = arith.constant 0 : i32
    %c0_i32_1 = arith.constant 0 : i32
    return %c0_i32, %c0_i32_0 : i32, i32
  }
  func.func @transform_3(%arg0: i32) -> (i32, i32) {
    %c0_i32 = arith.constant 0 : i32
    %c0_i32_0 = arith.constant 0 : i32
    %c0_i32_1 = arith.constant 0 : i32
    return %c0_i32, %c0_i32_0 : i32, i32
  }
  func.func @transform_4(%arg0: i32) -> (i32, i32) {
    %c0_i32 = arith.constant 0 : i32
    %c0_i32_0 = arith.constant 0 : i32
    %c0_i32_1 = arith.constant 0 : i32
    return %c0_i32, %c0_i32_0 : i32, i32
  }
  func.func @transform_5(%arg0: i32) -> (i32, i32) {
    %c0_i32 = arith.constant 0 : i32
    %c0_i32_0 = arith.constant 0 : i32
    return %arg0, %c0_i32 : i32, i32
  }
}

</mosaic_0001>

<llo_original>
// kernel: generator_forward.1
$region0: #{generator_forward.1}
  #allocation0 [shape = 'u32[]', space=smem, size = 0x4, offset = 0x4, fixed_abs, tag = 'smem constant byte address 0x4 - core index']
  #allocation1 [shape = 'u32[144,128]{1,0:T(1,128)}', space=vmem, size = 0x12000, scoped, tag = 'internal scratch']
  %s0 = inlined_call_operand.vmem [shape: bf16[64,32], index: 0, kind: input, shape index: {}]
  %s1 = inlined_call_operand.vmem [shape: bf16[32,128], index: 1, kind: input, shape index: {}]
  %s2 = inlined_call_operand.vmem [shape: f32[1,128], index: 2, kind: input, shape index: {}]
  %s3 = inlined_call_operand.vmem [shape: bf16[128,256], index: 3, kind: input, shape index: {}]
  %s4 = inlined_call_operand.vmem [shape: f32[1,256], index: 4, kind: input, shape index: {}]
  %s5 = inlined_call_operand.vmem [shape: bf16[64,256], index: 5, kind: output, shape index: {}]
  %s6 = sld [smem:[#allocation0]]
  $region53: #{generator_forward.1} parent=0
    _
  %s8 = ssub.s32 1, %s6
  %s9 = scalar_select 0, %s8, %s6
  loop: start=0, step=1, limit=4
  $region2: #{generator_forward.1} parent=0 // loop_pre_header
    _
  $region3: #{generator_forward.1} parent=0 // loop_header
    %s11 = sphi 0, %s15
    %p12 = scmp.ge.s32.totalorder %s11, 4
    %s21 = sphi 0, %s23
    %s24 = sphi 0, %s21
    %s25 = sphi 0, %s24
    %s41 = sphi 0, %s25
    %s45 = sphi 0, %s45
    %s47 = sphi 0, %s45
    %s48 = sphi 0, %s47
    %s62 = sphi 0, %s48
    %s66 = sphi 0, %s66
    %s68 = sphi 0, %s66
    %s69 = sphi 0, %s68
    %s83 = sphi 0, %s69
    %s87 = sphi 0, %s87
    %s89 = sphi 0, %s87
    %s90 = sphi 0, %s89
    %s104 = sphi 0, %s90
    %s108 = sphi 0, %s108
    %s110 = sphi 0, %s108
    %s111 = sphi 0, %s110
    %s125 = sphi 0, %s111
    %s131 = sphi 0, %s133
    %s134 = sphi 0, %s131
    %s135 = sphi 0, %s134
    %s151 = sphi 0, %s135
  $region4: #{generator_forward.1} parent=0 // loop_header_branch
    %14 = sbr.rel (%p12) target = $region8
  $region5: #{generator_forward.1} parent=0 // loop_body
    %s16 = ssub.s32 %s11, 1
    %s17 = ssub.s32 %s11, 2
    %s18 = sadd.s32 %s11, 1
    %s19 = ssub.s32 %s11, %s18
    %p20 = scmp.eq.s32.totalorder %s19, 0
    %s22 = sadd.s32 %s21, 1
    %s23 = scalar_select %p20, %s21, %s22
    %p26 = pneg %p20
    %p27 = scmp.eq.s32.totalorder %s11, 1
    %p28 = por %p26, %p27
    %p29 = scmp.ne.s32.totalorder %s21, %s24
    %p30 = scmp.eq.s32.totalorder %s11, 0
    %p31 = por %p29, %p30
    %p32 = scmp.ne.s32.totalorder %s21, %s24
    %p33 = scmp.eq.s32.totalorder %s16, 1
    %p34 = por %p32, %p33
    %p35 = scmp.ne.s32.totalorder %s24, %s25
    %p36 = scmp.eq.s32.totalorder %s16, 0
    %p37 = por %p35, %p36
    %p38 = scmp.ne.s32.totalorder %s24, %s25
    %p39 = scmp.eq.s32.totalorder %s17, 1
    %p40 = por %p38, %p39
    %p42 = scmp.ne.s32.totalorder %s25, %s41
    %p43 = scmp.eq.s32.totalorder %s17, 0
    %p44 = por %p42, %p43
    %s46 = sadd.s32 %s45, 1
    %p49 = scmp.eq.s32.totalorder %s11, 1
    %p50 = scmp.ne.s32.totalorder %s45, %s47
    %p51 = scmp.eq.s32.totalorder %s11, 0
    %p52 = por %p50, %p51
    %p53 = scmp.ne.s32.totalorder %s45, %s47
    %p54 = scmp.eq.s32.totalorder %s16, 1
    %p55 = por %p53, %p54
    %p56 = scmp.ne.s32.totalorder %s47, %s48
    %p57 = scmp.eq.s32.totalorder %s16, 0
    %p58 = por %p56, %p57
    %p59 = scmp.ne.s32.totalorder %s47, %s48
    %p60 = scmp.eq.s32.totalorder %s17, 1
    %p61 = por %p59, %p60
    %p63 = scmp.ne.s32.totalorder %s48, %s62
    %p64 = scmp.eq.s32.totalorder %s17, 0
    %p65 = por %p63, %p64
    %s67 = sadd.s32 %s66, 1
    %p70 = scmp.eq.s32.totalorder %s11, 1
    %p71 = scmp.ne.s32.totalorder %s66, %s68
    %p72 = scmp.eq.s32.totalorder %s11, 0
    %p73 = por %p71, %p72
    %p74 = scmp.ne.s32.totalorder %s66, %s68
    %p75 = scmp.eq.s32.totalorder %s16, 1
    %p76 = por %p74, %p75
    %p77 = scmp.ne.s32.totalorder %s68, %s69
    %p78 = scmp.eq.s32.totalorder %s16, 0
    %p79 = por %p77, %p78
    %p80 = scmp.ne.s32.totalorder %s68, %s69
    %p81 = scmp.eq.s32.totalorder %s17, 1
    %p82 = por %p80, %p81
    %p84 = scmp.ne.s32.totalorder %s69, %s83
    %p85 = scmp.eq.s32.totalorder %s17, 0
    %p86 = por %p84, %p85
    %s88 = sadd.s32 %s87, 1
    %p91 = scmp.eq.s32.totalorder %s11, 1
    %p92 = scmp.ne.s32.totalorder %s87, %s89
    %p93 = scmp.eq.s32.totalorder %s11, 0
    %p94 = por %p92, %p93
    %p95 = scmp.ne.s32.totalorder %s87, %s89
    %p96 = scmp.eq.s32.totalorder %s16, 1
    %p97 = por %p95, %p96
    %p98 = scmp.ne.s32.totalorder %s89, %s90
    %p99 = scmp.eq.s32.totalorder %s16, 0
    %p100 = por %p98, %p99
    %p101 = scmp.ne.s32.totalorder %s89, %s90
    %p102 = scmp.eq.s32.totalorder %s17, 1
    %p103 = por %p101, %p102
    %p105 = scmp.ne.s32.totalorder %s90, %s104
    %p106 = scmp.eq.s32.totalorder %s17, 0
    %p107 = por %p105, %p106
    %s109 = sadd.s32 %s108, 1
    %p112 = scmp.eq.s32.totalorder %s11, 1
    %p113 = scmp.ne.s32.totalorder %s108, %s110
    %p114 = scmp.eq.s32.totalorder %s11, 0
    %p115 = por %p113, %p114
    %p116 = scmp.ne.s32.totalorder %s108, %s110
    %p117 = scmp.eq.s32.totalorder %s16, 1
    %p118 = por %p116, %p117
    %p119 = scmp.ne.s32.totalorder %s110, %s111
    %p120 = scmp.eq.s32.totalorder %s16, 0
    %p121 = por %p119, %p120
    %p122 = scmp.ne.s32.totalorder %s110, %s111
    %p123 = scmp.eq.s32.totalorder %s17, 1
    %p124 = por %p122, %p123
    %p126 = scmp.ne.s32.totalorder %s111, %s125
    %p127 = scmp.eq.s32.totalorder %s17, 0
    %p128 = por %p126, %p127
    %s129 = ssub.s32 %s11, %s18
    %p130 = scmp.eq.s32.totalorder %s129, 0
    %s132 = sadd.s32 %s131, 1
    %s133 = scalar_select %p130, %s131, %s132
    %p136 = pneg %p130
    %p137 = scmp.eq.s32.totalorder %s11, 1
    %p138 = por %p136, %p137
    %p139 = scmp.ne.s32.totalorder %s131, %s134
    %p140 = scmp.eq.s32.totalorder %s11, 0
    %p141 = por %p139, %p140
    %p142 = scmp.ne.s32.totalorder %s131, %s134
    %p143 = scmp.eq.s32.totalorder %s16, 1
    %p144 = por %p142, %p143
    %p145 = scmp.ne.s32.totalorder %s134, %s135
    %p146 = scmp.eq.s32.totalorder %s16, 0
    %p147 = por %p145, %p146
    %p148 = scmp.ne.s32.totalorder %s134, %s135
    %p149 = scmp.eq.s32.totalorder %s17, 1
    %p150 = por %p148, %p149
    %p152 = scmp.ne.s32.totalorder %s135, %s151
    %p153 = scmp.eq.s32.totalorder %s17, 0
    %p154 = por %p152, %p153
    %p155 = scmp.le.s32.totalorder 1, %s11
    %p156 = scmp.lt.s32.totalorder %s11, 3
    %p157 = pnand %p155, %p156
    %p158 = pneg %p157
    // Predicated region
    $region9: #{generator_forward.1} parent=5 // pred_check
      _
    $region10: #{generator_forward.1} parent=5 // pred_check_branch
      %160 = sbr.rel (%p157) target = $region12
    $region11: #{generator_forward.1} parent=5 // pred_region
      %s161 = ssub.s32 %s11, 1
      // Predicated region
      $region13: #{generator_forward.1} parent=11 // pred_check
        %p162 = pneg %p58
      $region14: #{generator_forward.1} parent=11 // pred_check_branch
        %164 = sbr.rel (%p162) target = $region16
      $region15: #{generator_forward.1} parent=11 // pred_region
        _
      $region16: #{generator_forward.1} parent=11 // pred_fallthru
        _
      // Predicated region
      $region17: #{generator_forward.1} parent=11 // pred_check
        %p165 = pneg %p79
      $region18: #{generator_forward.1} parent=11 // pred_check_branch
        %167 = sbr.rel (%p165) target = $region20
      $region19: #{generator_forward.1} parent=11 // pred_region
        _
      $region20: #{generator_forward.1} parent=11 // pred_fallthru
        _
      // Predicated region
      $region21: #{generator_forward.1} parent=11 // pred_check
        %p168 = pneg %p100
      $region22: #{generator_forward.1} parent=11 // pred_check_branch
        %170 = sbr.rel (%p168) target = $region24
      $region23: #{generator_forward.1} parent=11 // pred_region
        _
      $region24: #{generator_forward.1} parent=11 // pred_fallthru
        _
      // Predicated region
      $region25: #{generator_forward.1} parent=11 // pred_check
        %p171 = pneg %p121
      $region26: #{generator_forward.1} parent=11 // pred_check_branch
        %173 = sbr.rel (%p171) target = $region28
      $region27: #{generator_forward.1} parent=11 // pred_region
        _
      $region28: #{generator_forward.1} parent=11 // pred_fallthru
        _
    $region12: #{generator_forward.1} parent=5 // pred_fallthru
      _
    %p174 = scmp.lt.s32.totalorder %s11, 2
    // Predicated region
    $region29: #{generator_forward.1} parent=5 // pred_check
      %p175 = pneg %p174
    $region30: #{generator_forward.1} parent=5 // pred_check_branch
      %177 = sbr.rel (%p175) target = $region32
    $region31: #{generator_forward.1} parent=5 // pred_region
      // Predicated region
      $region33: #{generator_forward.1} parent=31 // pred_check
        %p178 = pneg %p31
      $region34: #{generator_forward.1} parent=31 // pred_check_branch
        %180 = sbr.rel (%p178) target = $region36
      $region35: #{generator_forward.1} parent=31 // pred_region
        %s181 = smul.u32 4, %s11
        %p182 = scmp.lt.s32.totalorder %s181, 7
        %s183 = scalar_select %p182, %s181, 7
        %s184 = smul.addr %s183, 4
        %s185 = scalar_lea.vmem %s0, %s184
        %s186 = smul.u32 4, %s11
      $region36: #{generator_forward.1} parent=31 // pred_fallthru
        _
    $region32: #{generator_forward.1} parent=5 // pred_fallthru
      _
    %p187 = scmp.le.s32.totalorder 1, %s11
    %p188 = scmp.lt.s32.totalorder %s11, 3
    %p189 = pnand %p187, %p188
    %p190 = pneg %p189
    // Predicated region
    $region37: #{generator_forward.1} parent=5 // pred_check
      _
    $region38: #{generator_forward.1} parent=5 // pred_check_branch
      %192 = sbr.rel (%p189) target = $region40
    $region39: #{generator_forward.1} parent=5 // pred_region
      %s193 = ssub.s32 %s11, 1
      %s194 = smul.u32 4, %s16
      %p195 = scmp.lt.s32.totalorder %s194, 7
      %s196 = scalar_select %p195, %s194, 7
      %s197 = smul.addr %s196, 4
      %s198 = scalar_lea.vmem %s0, %s197
      %p199 = pneg %p37
      %p200 = pneg %p34
      %p201 = pneg %p58
      %p202 = pneg %p55
      %p203 = pneg %p79
      %p204 = pneg %p76
      %p205 = pneg %p100
      %p206 = pneg %p97
      %p207 = pneg %p121
      %p208 = pneg %p118
      %p209 = pneg %p147
      %p210 = pneg %p144
      %s211 = smul.u32 4, %s16
      %p212 = scmp.lt.s32.totalorder %s211, 7
      %s213 = scalar_select %p212, %s211, 7
      %s214 = smul.addr %s213, 2
      %s215 = smul.addr %s214, 4
      %s216 = scalar_lea.vmem %s5, %s215
      %s217 = smul.u32 4, %s16
      %p218 = scmp.lt.s32.totalorder %s217, 7
      %s219 = scalar_select %p218, %s217, 7
      %s220 = smul.addr %s219, 4
      %s221 = scalar_lea.vmem %s0, %s220
      %s222 = smul.u32 4, %s16
      %s223 = smul.u32 4, %s16
      %p224 = scmp.lt.s32.totalorder %s223, 7
      %s225 = scalar_select %p224, %s223, 7
      %s226 = smul.addr %s225, 2
      %s227 = smul.addr %s226, 4
      %s228 = scalar_lea.vmem %s5, %s227
      %s229 = smul.u32 4, %s16
      %v231 = vld [vmem:[%s221] sm:$0xf]
      %v232 = vld [vmem:[%s221 + $0x4] sm:$0xf]
      %v233 = vld [vmem:[%s221 + $0x8] sm:$0xf]
      %v234 = vld [vmem:[%s221 + $0xc] sm:$0xf]
      %v235 = vld [vmem:[%s1] sm:$0xf]
      %v236 = vld [vmem:[%s1 + $0x4] sm:$0xf]
      %v237 = vld [vmem:[%s1 + $0x8] sm:$0xf]
      %v238 = vld [vmem:[%s1 + $0xc] sm:$0xf]
      %v239 = vld [vmem:[%s2] sm:$0x1]
      %v241 = vlaneseq
      %v242 = vshrl.u32 %v241, 7
      %v243 = vsub.s32 0, %v242
      %v244 = vrot.slane %v239, %v243
      %v250 = vunpack.c.l.b16 %v231
      %v251 = vunpack.c.l.b16 %v232
      %v252 = vunpack.c.l.b16 %v233
      %v253 = vunpack.c.l.b16 %v234
      %v254 = vpack.c.b16 %v251, %v250
      %v255 = vpack.c.b16 %v253, %v252
      %v260 = vunpack.c.l.b16 %v235
      %v261 = vunpack.c.l.b16 %v236
      %v262 = vunpack.c.l.b16 %v237
      %v263 = vunpack.c.l.b16 %v238
      %v264 = vpack.c.b16 %v261, %v260
      %v265 = vpack.c.b16 %v263, %v262
      %vm268 = vcmask 261120
      %v270 = vsel %vm268, %v254, 0
      %v273 = vsel %vm268, %v255, 0
      %275 = vmatprep.subr.bf16.mxu0 0
      %276 = vmatpush1.bf16.msra.mxu0 %v264
      %277 = vmatprep.subr.bf16.mxu0 0
      %278 = vmatpush1.bf16.msra.mxu0 %v265
      %279 = vmatprep.subr.bf16.mxu0 0
      %280 = vmatpush1.bf16.msra.mxu0 0
      %281 = vmatprep.subr.bf16.mxu0 0
      %282 = vmatpush1.bf16.msra.mxu0 0
      %283 = vmatprep.subr.bf16.mxu0 0
      %284 = vmatpush1.bf16.msra.mxu0 0
      %285 = vmatprep.subr.bf16.mxu0 0
      %286 = vmatpush1.bf16.msra.mxu0 0
      %287 = vmatprep.subr.bf16.mxu0 0
      %288 = vmatpush1.bf16.msra.mxu0 0
      %289 = vmatprep.subr.bf16.mxu0 0
      %290 = vmatpush1.bf16.msra.mxu0 0
      %291 = vmatprep.subr.bf16.mxu0 0
      %292 = vmatpush1.bf16.msra.mxu0 0
      %293 = vmatprep.subr.bf16.mxu0 0
      %294 = vmatpush1.bf16.msra.mxu0 0
      %295 = vmatprep.subr.bf16.mxu0 0
      %296 = vmatpush1.bf16.msra.mxu0 0
      %297 = vmatprep.subr.bf16.mxu0 0
      %298 = vmatpush1.bf16.msra.mxu0 0
      %299 = vmatprep.subr.bf16.mxu0 0
      %300 = vmatpush1.bf16.msra.mxu0 0
      %301 = vmatprep.subr.bf16.mxu0 0
      %302 = vmatpush1.bf16.msra.mxu0 0
      %303 = vmatprep.subr.bf16.mxu0 0
      %304 = vmatpush1.bf16.msra.mxu0 0
      %305 = vmatprep.subr.bf16.mxu0 0
      %306 = vmatpush1.bf16.msra.mxu0 0
      %307 = vmatprep.mubr.bf16.mxu0 0
      %308 = vmatmul.mubr.bf16.gmra.mrb[0].mxu0 %v270
      %v309 = vpop.f32.mrb[0].mxu0
      %v310 = vadd.f32 %v244, %v309
      %v311 = vpop.f32.mrb[0].mxu0
      %v312 = vpop.f32.mrb[0].mxu0
      %v313 = vadd.f32 %v244, %v312
      %v314 = vpop.f32.mrb[0].mxu0
      %315 = vmatprep.mubr.bf16.mxu0 0
      %316 = vmatmul.mubr.bf16.gmra.mrb[0].mxu0 %v273
      %v317 = vpop.f32.mrb[0].mxu0
      %v318 = vadd.f32 %v244, %v317
      %v319 = vpop.f32.mrb[0].mxu0
      %v320 = vpop.f32.mrb[0].mxu0
      %v321 = vadd.f32 %v244, %v320
      %v322 = vpop.f32.mrb[0].mxu0
      %323 = vdwg.mxu0
      %v324 = vmax.f32 %v310, 0.0
      %v325 = vmax.f32 %v313, 0.0
      %v326 = vmax.f32 %v318, 0.0
      %v327 = vmax.f32 %v321, 0.0
      %v328 = vpack.c.bf16 %v325, %v324
      %v329 = vpack.c.bf16 %v327, %v326
      %v330 = vld [vmem:[%s3] sm:$0xff]
      %v331 = vld [vmem:[%s3 + $0x8] sm:$0xff]
      %v332 = vld [vmem:[%s3 + $0x10] sm:$0xff]
      %v333 = vld [vmem:[%s3 + $0x18] sm:$0xff]
      %v334 = vld [vmem:[%s3 + $0x20] sm:$0xff]
      %v335 = vld [vmem:[%s3 + $0x28] sm:$0xff]
      %v336 = vld [vmem:[%s3 + $0x30] sm:$0xff]
      %v337 = vld [vmem:[%s3 + $0x38] sm:$0xff]
      %v338 = vld [vmem:[%s3 + $0x40] sm:$0xff]
      %v339 = vld [vmem:[%s3 + $0x48] sm:$0xff]
      %v340 = vld [vmem:[%s3 + $0x50] sm:$0xff]
      %v341 = vld [vmem:[%s3 + $0x58] sm:$0xff]
      %v342 = vld [vmem:[%s3 + $0x60] sm:$0xff]
      %v343 = vld [vmem:[%s3 + $0x68] sm:$0xff]
      %v344 = vld [vmem:[%s3 + $0x70] sm:$0xff]
      %v345 = vld [vmem:[%s3 + $0x78] sm:$0xff]
      %v346 = vld [vmem:[%s4] sm:$0x3]
      %v348 = vlaneseq
      %v349 = vshrl.u32 %v348, 7
      %v350 = vsub.s32 0, %v349
      %v351 = vrot.slane %v346, %v350
      %v352 = vlaneseq
      %v353 = vshrl.u32 %v352, 7
      %v354 = vsub.s32 1, %v353
      %v355 = vrot.slane %v346, %v354
      %v374 = vunpack.c.l.b16 %v330
      %v375 = vunpack.c.h.b16 %v330
      %v376 = vunpack.c.l.b16 %v331
      %v377 = vunpack.c.h.b16 %v331
      %v378 = vunpack.c.l.b16 %v332
      %v379 = vunpack.c.h.b16 %v332
      %v380 = vunpack.c.l.b16 %v333
      %v381 = vunpack.c.h.b16 %v333
      %v382 = vunpack.c.l.b16 %v334
      %v383 = vunpack.c.h.b16 %v334
      %v384 = vunpack.c.l.b16 %v335
      %v385 = vunpack.c.h.b16 %v335
      %v386 = vunpack.c.l.b16 %v336
      %v387 = vunpack.c.h.b16 %v336
      %v388 = vunpack.c.l.b16 %v337
      %v389 = vunpack.c.h.b16 %v337
      %v390 = vunpack.c.l.b16 %v338
      %v391 = vunpack.c.h.b16 %v338
      %v392 = vunpack.c.l.b16 %v339
      %v393 = vunpack.c.h.b16 %v339
      %v394 = vunpack.c.l.b16 %v340
      %v395 = vunpack.c.h.b16 %v340
      %v396 = vunpack.c.l.b16 %v341
      %v397 = vunpack.c.h.b16 %v341
      %v398 = vunpack.c.l.b16 %v342
      %v399 = vunpack.c.h.b16 %v342
      %v400 = vunpack.c.l.b16 %v343
      %v401 = vunpack.c.h.b16 %v343
      %v402 = vunpack.c.l.b16 %v344
      %v403 = vunpack.c.h.b16 %v344
      %v404 = vunpack.c.l.b16 %v345
      %v405 = vunpack.c.h.b16 %v345
      %v406 = vpack.c.b16 %v376, %v374
      %v407 = vpack.c.b16 %v377, %v375
      %v408 = vpack.c.b16 %v380, %v378
      %v409 = vpack.c.b16 %v381, %v379
      %v410 = vpack.c.b16 %v384, %v382
      %v411 = vpack.c.b16 %v385, %v383
      %v412 = vpack.c.b16 %v388, %v386
      %v413 = vpack.c.b16 %v389, %v387
      %v414 = vpack.c.b16 %v392, %v390
      %v415 = vpack.c.b16 %v393, %v391
      %v416 = vpack.c.b16 %v396, %v394
      %v417 = vpack.c.b16 %v397, %v395
      %v418 = vpack.c.b16 %v400, %v398
      %v419 = vpack.c.b16 %v401, %v399
      %v420 = vpack.c.b16 %v404, %v402
      %v421 = vpack.c.b16 %v405, %v403
      %438 = vmatprep.subr.bf16.mxu0 %v407
      %439 = vmatpush1.bf16.msra.mxu0 %v406
      %440 = vmatprep.subr.bf16.mxu0 %v409
      %441 = vmatpush1.bf16.msra.mxu0 %v408
      %442 = vmatprep.subr.bf16.mxu0 %v411
      %443 = vmatpush1.bf16.msra.mxu0 %v410
      %444 = vmatprep.subr.bf16.mxu0 %v413
      %445 = vmatpush1.bf16.msra.mxu0 %v412
      %446 = vmatprep.subr.bf16.mxu0 %v415
      %447 = vmatpush1.bf16.msra.mxu0 %v414
      %448 = vmatprep.subr.bf16.mxu0 %v417
      %449 = vmatpush1.bf16.msra.mxu0 %v416
      %450 = vmatprep.subr.bf16.mxu0 %v419
      %451 = vmatpush1.bf16.msra.mxu0 %v418
      %452 = vmatprep.subr.bf16.mxu0 %v421
      %453 = vmatpush1.bf16.msra.mxu0 %v420
      %454 = vmatprep.subr.bf16.mxu0 0
      %455 = vmatpush1.bf16.msra.mxu0 0
      %456 = vmatprep.subr.bf16.mxu0 0
      %457 = vmatpush1.bf16.msra.mxu0 0
      %458 = vmatprep.subr.bf16.mxu0 0
      %459 = vmatpush1.bf16.msra.mxu0 0
      %460 = vmatprep.subr.bf16.mxu0 0
      %461 = vmatpush1.bf16.msra.mxu0 0
      %462 = vmatprep.subr.bf16.mxu0 0
      %463 = vmatpush1.bf16.msra.mxu0 0
      %464 = vmatprep.subr.bf16.mxu0 0
      %465 = vmatpush1.bf16.msra.mxu0 0
      %466 = vmatprep.subr.bf16.mxu0 0
      %467 = vmatpush1.bf16.msra.mxu0 0
      %468 = vmatprep.subr.bf16.mxu0 0
      %469 = vmatpush1.bf16.msra.mxu0 0
      %470 = vmatprep.mubr.bf16.mxu0 0
      %471 = vmatmul.mubr.bf16.gmra.mrb[0].mxu0 %v328
      %v472 = vpop.f32.mrb[0].mxu0
      %v473 = vadd.f32 %v351, %v472
      %v474 = vpop.f32.mrb[0].mxu0
      %v475 = vadd.f32 %v355, %v474
      %v476 = vpop.f32.mrb[0].mxu0
      %v477 = vadd.f32 %v351, %v476
      %v478 = vpop.f32.mrb[0].mxu0
      %v479 = vadd.f32 %v355, %v478
      %480 = vmatprep.mubr.bf16.mxu0 0
      %481 = vmatmul.mubr.bf16.gmra.mrb[0].mxu0 %v329
      %v482 = vpop.f32.mrb[0].mxu0
      %v483 = vadd.f32 %v351, %v482
      %v484 = vpop.f32.mrb[0].mxu0
      %v485 = vadd.f32 %v355, %v484
      %v486 = vpop.f32.mrb[0].mxu0
      %v487 = vadd.f32 %v351, %v486
      %v488 = vpop.f32.mrb[0].mxu0
      %v489 = vadd.f32 %v355, %v488
      %490 = vdwg.mxu0
      %v491 = vtanh.pop %v473
      %v492 = vtanh.pop %v475
      %v493 = vtanh.pop %v477
      %v494 = vtanh.pop %v479
      %v495 = vtanh.pop %v483
      %v496 = vtanh.pop %v485
      %v497 = vtanh.pop %v487
      %v498 = vtanh.pop %v489
      %v499 = vpack.c.bf16 %v493, %v491
      %v500 = vpack.c.bf16 %v494, %v492
      %v501 = vpack.c.bf16 %v497, %v495
      %v502 = vpack.c.bf16 %v498, %v496
      %v507 = vunpack.c.l.b16 %v499
      %v508 = vunpack.c.l.b16 %v500
      %v509 = vunpack.c.h.b16 %v499
      %v510 = vunpack.c.h.b16 %v500
      %v511 = vunpack.c.l.b16 %v501
      %v512 = vunpack.c.l.b16 %v502
      %v513 = vunpack.c.h.b16 %v501
      %v514 = vunpack.c.h.b16 %v502
      %v515 = vpack.c.b16 %v508, %v507
      %v516 = vpack.c.b16 %v510, %v509
      %v517 = vpack.c.b16 %v512, %v511
      %v518 = vpack.c.b16 %v514, %v513
      %523 = vst [vmem:[%s228] sm:$0xff] %v515
      %524 = vst [vmem:[%s228 + $0x8] sm:$0xff] %v516
      %525 = vst [vmem:[%s228 + $0x10] sm:$0xff] %v517
      %526 = vst [vmem:[%s228 + $0x18] sm:$0xff] %v518
      %s527 = smul.u32 4, %s16
      %p528 = scmp.lt.s32.totalorder %s527, 7
      %s529 = scalar_select %p528, %s527, 7
      %s530 = smul.addr %s529, 2
      %s531 = smul.addr %s530, 4
      %s532 = scalar_lea.vmem %s5, %s531
      // Predicated region
      $region41: #{generator_forward.1} parent=39 // pred_check
        %p533 = pneg %p144
      $region42: #{generator_forward.1} parent=39 // pred_check_branch
        %535 = sbr.rel (%p533) target = $region44
      $region43: #{generator_forward.1} parent=39 // pred_region
        %s536 = smul.u32 4, %s16
      $region44: #{generator_forward.1} parent=39 // pred_fallthru
        _
    $region40: #{generator_forward.1} parent=5 // pred_fallthru
      _
    %p537 = scmp.le.s32.totalorder 2, %s11
    // Predicated region
    $region45: #{generator_forward.1} parent=5 // pred_check
      %p538 = pneg %p537
    $region46: #{generator_forward.1} parent=5 // pred_check_branch
      %540 = sbr.rel (%p538) target = $region48
    $region47: #{generator_forward.1} parent=5 // pred_region
      %s541 = ssub.s32 %s11, 2
      // Predicated region
      $region49: #{generator_forward.1} parent=47 // pred_check
        %p542 = pneg %p150
      $region50: #{generator_forward.1} parent=47 // pred_check_branch
        %544 = sbr.rel (%p542) target = $region52
      $region51: #{generator_forward.1} parent=47 // pred_region
        %s545 = smul.u32 4, %s17
        %p546 = scmp.lt.s32.totalorder %s545, 7
        %s547 = scalar_select %p546, %s545, 7
        %s548 = smul.addr %s547, 2
        %s549 = smul.addr %s548, 4
        %s550 = scalar_lea.vmem %s5, %s549
      $region52: #{generator_forward.1} parent=47 // pred_fallthru
        _
    $region48: #{generator_forward.1} parent=5 // pred_fallthru
      _
  $region6: #{generator_forward.1} parent=0 // loop_footer
    %s15 = sadd.s32 1, %s11
  $region7: #{generator_forward.1} parent=0 // loop_footer_branch
    %10 = sbr.rel target = $region3
  $region8: #{generator_forward.1} parent=0 // loop_exit
    _

</llo_original>
